<compile_context>
chip_gen: v6e
topology: v6e:2x2x1
jax: 0.10.0
libtpu: 0.0.40
codegen_flags: <defaults>
</compile_context>

<pallas_src>
import functools

import jax
import jax.numpy as jnp
from jax.experimental import pallas as pl
from jax.experimental.pallas import tpu as pltpu


def _vpe_kernel(seed_ref, x_ref, pos_ref, o_ref, *, dropout_p, training, batch):
    # x_ref / o_ref: (ts, B*E) lane-dense tiles; pos_ref: (ts, E).
    if training and dropout_p >= 1.0:
        # nn.Dropout(p=1.0) zeroes everything (avoid inf from 1/(1-p)).
        o_ref[...] = jnp.zeros(o_ref.shape, o_ref.dtype)
        return

    compute_dtype = jnp.bfloat16 if o_ref.dtype == jnp.bfloat16 else jnp.float32
    pos = pos_ref[...].astype(compute_dtype)
    if batch > 1:
        # Replicate the (ts, E) pos tile across the B batch chunks of the
        # flattened lane axis.  Minor-dim concat is cheap VPU/XLU filler in an
        # HBM-bound kernel and avoids broadcasting pos in HBM.
        pos = jnp.concatenate([pos] * batch, axis=-1)       # (ts, B*E)
    y = x_ref[...].astype(compute_dtype) + pos

    if training and dropout_p > 0.0:
        # Inverted dropout with the hardware PRNG.  The user seed and the
        # seq-tile id are folded by prng_seed itself.
        # TODO(synk): mask is not bit-identical to torch.nn.Dropout and also
        # depends on the tiling choice (only distribution/scaling match).
        pltpu.prng_seed(seed_ref[0], pl.program_id(0))
        bits = pltpu.prng_random_bits(y.shape)
        if bits.dtype != jnp.uint32:
            bits = pltpu.bitcast(bits, jnp.uint32)
        thresh = jnp.uint32(min(int(dropout_p * (2 ** 32)), 2 ** 32 - 1))
        keep = bits >= thresh                                # P(keep) = 1 - p
        inv_keep = jnp.float32(1.0 / (1.0 - dropout_p))      # keep scale in f32
        y = jnp.where(keep, y.astype(jnp.float32) * inv_keep, jnp.float32(0.0))

    o_ref[...] = y.astype(o_ref.dtype)


def _physical_vmem_bytes():
    """Per-core physical VMEM (128 MiB on v5e/v6e, 64 MiB on v7x)."""
    try:
        info = pltpu.get_tpu_info()
        vmem = getattr(info, "vmem_capacity_bytes", None)
        if vmem:
            return int(vmem)
    except Exception:
        pass
    return 64 << 20   # conservative fallback (v7x-sized)


def _choose_seq_tile(rows, S):
    """8-aligned seq-tile height; guarantees >=2 tiles when S >= 16 (v7x 2 TCs)."""
    rows = max(8, min(int(rows), 8192) // 8 * 8)
    if rows >= S:
        if S >= 16:
            rows = ((S + 1) // 2 + 7) // 8 * 8   # ~half of S, 8-aligned -> 2 tiles
        else:
            rows = S                              # tiny S: whole axis is legal
    return rows


def visual_positional_encoding(token_embedding, pos_embedding, *,
                               dropout_p=0.1, training=False, seed=0,
                               seq_tile=None, force_pallas=False):
    """token_embedding: (S, B, E); pos_embedding: (maxlen, 1, E) or (maxlen, E)."""
    S, B, E = token_embedding.shape
    if pos_embedding.ndim == 2:
        pos_embedding = pos_embedding[:, None, :]
    assert pos_embedding.shape[0] >= S and pos_embedding.shape[1] == 1
    assert pos_embedding.shape[2] == E

    pos2d = pos_embedding[:S, 0, :]                       # (S, E) cheap slice
    # Match PyTorch type promotion (bf16 token + f32 pos -> f32 output, ...).
    out_dtype = jnp.promote_types(token_embedding.dtype, pos_embedding.dtype)
    o_item = jnp.dtype(out_dtype).itemsize
    x_item = jnp.dtype(token_embedding.dtype).itemsize
    p_item = jnp.dtype(pos2d.dtype).itemsize

    # Small-shape fast path: pallas_call launch + pipeline ramp dominates a
    # single streaming add up to ~a tile of data, and plain XLA can also fuse
    # the broadcast-add with surrounding ops.
    if not force_pallas and S * B * E * o_item < (2 << 20):
        y = (token_embedding.astype(jnp.float32)
             + pos2d[:, None, :].astype(jnp.float32))
        if training and dropout_p > 0.0:
            if dropout_p >= 1.0:
                y = jnp.zeros_like(y)
            else:
                keep = jax.random.bernoulli(jax.random.PRNGKey(seed),
                                            1.0 - dropout_p, y.shape)
                y = jnp.where(keep, y / (1.0 - dropout_p), 0.0)
        return y.astype(out_dtype)

    # Generation-aware budgets: cap scoped VMEM at half the physical capacity
    # (64 MiB on v5e/v6e, 32 MiB on v7x) and size tiles from that budget.
    vmem_cap = _physical_vmem_bytes() // 2
    target_tile_bytes = min(8 << 20, vmem_cap // 6)       # ~4-8 MiB per buffer
    bytes_per_row_live = 2 * (B * E * (x_item + o_item) + E * p_item)  # 2x buffered
    budget = max(vmem_cap - (4 << 20), 8 << 20)

    if seq_tile is not None:
        ts = min(int(seq_tile), S)
        if ts <= 0 or (ts != S and ts % 8 != 0):
            raise ValueError(
                f"seq_tile must be a positive multiple of 8 (or >= S), got {seq_tile}")
        if ts * bytes_per_row_live + (2 << 20) > vmem_cap:
            raise ValueError(
                f"seq_tile={seq_tile} needs ~{(ts * bytes_per_row_live) >> 20} MiB "
                f"of VMEM, over the {vmem_cap >> 20} MiB budget for this TPU generation")
    else:
        rows_budget = budget // bytes_per_row_live
        rows_target = target_tile_bytes // max(1, B * E * max(x_item, o_item))
        ts = _choose_seq_tile(min(rows_budget, rows_target), S)
    # TODO(synk): if B*E is so large that even an 8-row tile overflows the
    # VMEM budget, the flattened lane axis would need tiling as well.

    needed = ts * bytes_per_row_live
    vmem_limit = int(min(max(needed + (4 << 20), 16 << 20), vmem_cap))

    grid = (pl.cdiv(S, ts),)          # partial last seq block masked by Pallas
    kernel = functools.partial(_vpe_kernel, dropout_p=float(dropout_p),
                               training=bool(training), batch=int(B))
    seed_arr = jnp.asarray([seed], dtype=jnp.int32)
    x_flat = token_embedding.reshape(S, B * E)            # free row-major view

    out_flat = pl.pallas_call(
        kernel,
        out_shape=jax.ShapeDtypeStruct((S, B * E), out_dtype),
        grid_spec=pltpu.PrefetchScalarGridSpec(
            num_scalar_prefetch=1,                          # PRNG seed in SMEM
            grid=grid,
            in_specs=[pl.BlockSpec((ts, B * E), lambda i, sref: (i, 0)),
                      pl.BlockSpec((ts, E), lambda i, sref: (i, 0))],
            out_specs=pl.BlockSpec((ts, B * E), lambda i, sref: (i, 0)),
        ),
        compiler_params=pltpu.CompilerParams(
            dimension_semantics=("parallel",),
            vmem_limit_bytes=vmem_limit,
        ),
    )(seed_arr, x_flat, pos2d)

    return out_flat.reshape(S, B, E)


if __name__ == "__main__":
    # Small shapes consistent with the module: seq=8, batch=2, emb=32, maxlen=512.
    S, B, E, MAXLEN = 8, 2, 32, 512
    DROPOUT_P = 0.1

    key = jax.random.PRNGKey(0)
    k_pos, k_x = jax.random.split(key)

    # Deterministic "parameter" init (module uses torch.randn(maxlen, emb_size)).
    pos_embedding = jax.random.normal(k_pos, (MAXLEN, 1, E), dtype=jnp.float32)
    token_embedding = jax.random.normal(k_x, (S, B, E), dtype=jnp.float32)

    # Eval-mode forward (dropout is identity, matching nn.Dropout.eval()).
    # force_pallas=True so the toy shape still exercises the actual kernel.
    out = visual_positional_encoding(token_embedding, pos_embedding,
                                     dropout_p=DROPOUT_P, training=False,
                                     force_pallas=True)
    out = jax.block_until_ready(out)

    ref = token_embedding + pos_embedding[:S]
    assert out.shape == (S, B, E)
    assert jnp.allclose(out, ref, atol=1e-6), "mismatch vs reference add"

    # Training-mode path exercises the on-chip PRNG dropout. pltpu.prng_* has
    # no CPU/interpret lowering, so only run it on a real TPU backend.
    if jax.default_backend() == "tpu":
        out_train = visual_positional_encoding(
            token_embedding, pos_embedding, dropout_p=DROPOUT_P,
            training=True, seed=1234, force_pallas=True)
        out_train = jax.block_until_ready(out_train)
        assert out_train.shape == (S, B, E)
        kept = out_train != 0
        # Surviving elements must equal (token + pos) / (1 - p).
        assert jnp.allclose(jnp.where(kept, out_train, 0.0),
                            jnp.where(kept, ref / (1.0 - DROPOUT_P), 0.0),
                            atol=1e-5), "dropout scaling mismatch"

    print("KERNEL_OK")
</pallas_src>

<mosaic_0001>
module attributes {stable_mosaic.version = 11 : i64} {
  func.func @_vpe_kernel(%arg0: i32, %arg1: memref<1xi32, #tpu.memory_space<smem>>, %arg2: memref<8x64xf32, #tpu.memory_space<vmem>>, %arg3: memref<8x32xf32, #tpu.memory_space<vmem>>, %arg4: memref<8x64xf32, #tpu.memory_space<vmem>>) attributes {dimension_semantics = [#tpu.dimension_semantics<parallel>], iteration_bounds = array<i64: 1>, scalar_prefetch = 1 : i64, scratch_operands = 0 : i64, tpu.core_type = #tpu.core_type<tc>, window_params = [{transform_indices = @transform_0, window_bounds = array<i64: 8, 64>}, {transform_indices = @transform_1, window_bounds = array<i64: 8, 32>}, {transform_indices = @transform_2, window_bounds = array<i64: 8, 64>}]} {
    %c0 = arith.constant 0 : index
    %c0_0 = arith.constant 0 : index
    %0 = vector.load %arg3[%c0, %c0_0] : memref<8x32xf32, #tpu.memory_space<vmem>>, vector<8x32xf32>
    %1 = tpu.concatenate %0, %0 in 1 : vector<8x32xf32>, vector<8x32xf32> -> vector<8x64xf32>
    %c0_1 = arith.constant 0 : index
    %c0_2 = arith.constant 0 : index
    %2 = vector.load %arg2[%c0_1, %c0_2] : memref<8x64xf32, #tpu.memory_space<vmem>>, vector<8x64xf32>
    %3 = arith.addf %2, %1 : vector<8x64xf32>
    %c0_3 = arith.constant 0 : index
    %c0_4 = arith.constant 0 : index
    %4 = vector.load %arg4[%c0_3, %c0_4] : memref<8x64xf32, #tpu.memory_space<vmem>>, vector<8x64xf32>
    tpu.vector_store %arg4[%c0_3, %c0_4], %3 {strides = array<i32>} : memref<8x64xf32, #tpu.memory_space<vmem>>, vector<8x64xf32>,
    return
  }
  func.func @transform_0(%arg0: i32, %arg1: memref<1xi32, #tpu.memory_space<smem>>) -> (i32, i32) {
    %c0_i32 = arith.constant 0 : i32
    %c0_i32_0 = arith.constant 0 : i32
    return %arg0, %c0_i32 : i32, i32
  }
  func.func @transform_1(%arg0: i32, %arg1: memref<1xi32, #tpu.memory_space<smem>>) -> (i32, i32) {
    %c0_i32 = arith.constant 0 : i32
    %c0_i32_0 = arith.constant 0 : i32
    return %arg0, %c0_i32 : i32, i32
  }
  func.func @transform_2(%arg0: i32, %arg1: memref<1xi32, #tpu.memory_space<smem>>) -> (i32, i32) {
    %c0_i32 = arith.constant 0 : i32
    %c0_i32_0 = arith.constant 0 : i32
    return %arg0, %c0_i32 : i32, i32
  }
}

</mosaic_0001>

<llo_original>
// kernel: tpu_custom_call.1
$region0: #{tpu_custom_call.1}
  #allocation0 [shape = 'u32[]', space=smem, size = 0x4, offset = 0x4, fixed_abs, tag = 'smem constant byte address 0x4 - core index']
  #allocation1 [shape = 'u32[144,128]{1,0:T(1,128)}', space=vmem, size = 0x12000, scoped, tag = 'internal scratch']
  #allocation2 [shape = 's32[1]{0}', space=sflag, size = 0x4, scoped, tag = 'scoped memory for tpu_custom_call.1']
  #allocation3 [shape = 's32[1]{0:T(128)S(6)}', space=smem, size = 0x200, scoped, tag = 'prefetched SMEM operand 0']
  %s0 = inlined_call_operand.<no memory space> [shape: s32[1], index: 0, kind: input, shape index: {}]
  %s1 = inlined_call_operand.hbm [shape: f32[8,64], index: 1, kind: input, shape index: {}]
  %s2 = inlined_call_operand.hbm [shape: f32[8,32], index: 2, kind: input, shape index: {}]
  %s3 = inlined_call_operand.hbm [shape: f32[8,64], index: 3, kind: output, shape index: {}]
  %s4 = sld [smem:[#allocation0]]
  $region26: #{tpu_custom_call.1} parent=0
    _
  %s6 = ssub.s32 1, %s4
  %s7 = scalar_select 0, %s6, %s4
  %8 = sst [smem:[#allocation3]] %s0
  $region1: #{tpu_custom_call.1} parent=0
    #allocation4 [shape = 'u8[4096]{0}', space=vmem, size = 0x1000, scoped, tag = 'input window, operand 1, single buffered']
    #allocation5 [shape = 's32[1]{0}', space=sflag, size = 0x4, scoped, tag = 'scoped memory for tpu_custom_call.1']
    #allocation6 [shape = 's32[1]{0}', space=sflag, size = 0x4, scoped, tag = 'scoped memory for tpu_custom_call.1']
    #allocation7 [shape = 'u8[4096]{0}', space=vmem, size = 0x1000, scoped, tag = 'input window, operand 2, single buffered']
    #allocation8 [shape = 's32[1]{0}', space=sflag, size = 0x4, scoped, tag = 'scoped memory for tpu_custom_call.1']
    #allocation9 [shape = 'u8[4096]{0}', space=vmem, size = 0x1000, scoped, tag = 'output window, operand 0, single buffered']
    %9 = vsyncpa [#allocation5], 0
    %10 = vsyncpa [#allocation8], 0
    %11 = vsyncpa [#allocation6], 0
    // Predicated region
    $region2: #{tpu_custom_call.1} parent=1 // pred_check
      _
    $region3: #{tpu_custom_call.1} parent=1 // pred_check_branch
      %13 = sbr.rel (0) target = $region5
    $region4: #{tpu_custom_call.1} parent=1 // pred_region
      %s15 = ssub.s32 128, 128
      %16 = vsyncadd [#allocation5], %s15
      %s18 = sshll.u32 [#allocation4], 4
      %s19 = int_to_ptr.vmem [resolvable:$true] %s18
      %21 = dma.hbm_to_vmem [thread:$0]  %s1, 128, %s19, [#allocation5]
    $region5: #{tpu_custom_call.1} parent=1 // pred_fallthru
      _
    // Predicated region
    $region6: #{tpu_custom_call.1} parent=1 // pred_check
      _
    $region7: #{tpu_custom_call.1} parent=1 // pred_check_branch
      %23 = sbr.rel (0) target = $region9
    $region8: #{tpu_custom_call.1} parent=1 // pred_region
      %s25 = ssub.s32 128, 128
      %26 = vsyncadd [#allocation8], %s25
      %s28 = sshll.u32 [#allocation7], 4
      %s29 = int_to_ptr.vmem [resolvable:$true] %s28
      %31 = dma.hbm_to_vmem [thread:$0]  %s2, 128, %s29, [#allocation8]
    $region9: #{tpu_custom_call.1} parent=1 // pred_fallthru
      _
    // Predicated region
    $region10: #{tpu_custom_call.1} parent=1 // pred_check
      _
    $region11: #{tpu_custom_call.1} parent=1 // pred_check_branch
      %33 = sbr.rel (0) target = $region13
    $region12: #{tpu_custom_call.1} parent=1 // pred_region
      %34 = dma.done [#allocation5], 128
    $region13: #{tpu_custom_call.1} parent=1 // pred_fallthru
      _
    // Predicated region
    $region14: #{tpu_custom_call.1} parent=1 // pred_check
      _
    $region15: #{tpu_custom_call.1} parent=1 // pred_check_branch
      %36 = sbr.rel (0) target = $region17
    $region16: #{tpu_custom_call.1} parent=1 // pred_region
      %37 = dma.done [#allocation8], 128
    $region17: #{tpu_custom_call.1} parent=1 // pred_fallthru
      _
    %v38 = vld [vmem:[#allocation7] sm:$0xff]
    %40 = vrot.lane.b32.xlu0 %v38, 32
    %v41 = vpop.permute.xlu0 %40
    %vm43 = vcmask 261120
    %v44 = vsel %vm43, %v38, %v41
    %v45 = vld [vmem:[#allocation4] sm:$0xff]
    %v46 = vadd.f32 %v45, %v44
    %vm47 = vcmask 523264
    %48 = vst.msk [vmem:[#allocation9] sm:$0xff] %vm47, %v46
    // Predicated region
    $region18: #{tpu_custom_call.1} parent=1 // pred_check
      _
    $region19: #{tpu_custom_call.1} parent=1 // pred_check_branch
      %50 = sbr.rel (0) target = $region21
    $region20: #{tpu_custom_call.1} parent=1 // pred_region
      %s52 = ssub.s32 128, 128
      %53 = vsyncadd [#allocation6], %s52
      %s55 = sshll.u32 [#allocation9], 4
      %s56 = int_to_ptr.vmem [resolvable:$true] %s55
      %58 = dma.vmem_to_hbm [thread:$0]  %s56, 128, %s3, [#allocation6]
    $region21: #{tpu_custom_call.1} parent=1 // pred_fallthru
      _
    // Predicated region
    $region22: #{tpu_custom_call.1} parent=1 // pred_check
      _
    $region23: #{tpu_custom_call.1} parent=1 // pred_check_branch
      %60 = sbr.rel (0) target = $region25
    $region24: #{tpu_custom_call.1} parent=1 // pred_region
      %61 = dma.done [#allocation6], 128
    $region25: #{tpu_custom_call.1} parent=1 // pred_fallthru
      _
    %62 = vsyncpa [#allocation5], 1
    %63 = vsyncpa [#allocation8], 1
    %64 = vsyncpa [#allocation6], 1

</llo_original>
